<compile_context>
chip_gen: v7x
topology: tpu7x:2x2x1
jax: 0.10.0
libtpu: 0.0.40
codegen_flags: <defaults>
</compile_context>

<pallas_src>
import jax
import jax.numpy as jnp
from jax.experimental import pallas as pl
from jax.experimental.pallas import tpu as pltpu


def _round_up(x, m):
    return ((x + m - 1) // m) * m


def _pow2_floor(x):
    return 1 << (max(int(x), 1).bit_length() - 1)


# ----------------------------------------------------------------------------
# Kernel 1: fused per-layer propagation step.
#   e_out   = (G @ e)            cast to bf16   (next layer's input)
#   sum_out = sum_in + (G @ e)   in f32         (running layer sum)
# G streamed as (tm, tk) bf16 tiles (double-buffered), e streamed as (tk, D)
# bf16 tiles, f32 (tm, D) accumulator in VMEM scratch; init on k==0, fused
# cast + layer-sum update on the last k.  sum_in is buffer-aliased to sum_out.
# ----------------------------------------------------------------------------
def _propagate_kernel(g_ref, e_ref, sum_ref, e_out_ref, sum_out_ref, acc_ref):
    k = pl.program_id(1)

    @pl.when(k == 0)
    def _init():
        acc_ref[...] = jnp.zeros_like(acc_ref)

    acc_ref[...] += jnp.dot(g_ref[...], e_ref[...],
                            preferred_element_type=jnp.float32)

    @pl.when(k == pl.num_programs(1) - 1)
    def _finalize():
        e_out_ref[...] = acc_ref[...].astype(e_out_ref.dtype)
        sum_out_ref[...] = sum_ref[...] + acc_ref[...]


def _make_propagate(n_pad, d, tm, tk):
    flops = 2 * n_pad * n_pad * d
    bytes_accessed = (
        n_pad * n_pad * 2                         # G stream (bf16)
        + (n_pad // tm) * n_pad * d * 2           # e re-streamed per row tile
        + n_pad * d * 4                           # sum_in (f32)
        + n_pad * d * (2 + 4)                     # e_out (bf16) + sum_out (f32)
    )
    return pl.pallas_call(
        _propagate_kernel,
        out_shape=(
            jax.ShapeDtypeStruct((n_pad, d), jnp.bfloat16),   # next-layer e
            jax.ShapeDtypeStruct((n_pad, d), jnp.float32),    # layer sum
        ),
        grid_spec=pltpu.PrefetchScalarGridSpec(
            num_scalar_prefetch=0,
            grid=(n_pad // tm, n_pad // tk),
            in_specs=[
                pl.BlockSpec((tm, tk), lambda i, k: (i, k)),  # G tiles
                pl.BlockSpec((tk, d), lambda i, k: (k, 0)),   # e tiles (stream)
                pl.BlockSpec((tm, d), lambda i, k: (i, 0)),   # running sum
            ],
            out_specs=[
                pl.BlockSpec((tm, d), lambda i, k: (i, 0)),
                pl.BlockSpec((tm, d), lambda i, k: (i, 0)),
            ],
            scratch_shapes=[pltpu.VMEM((tm, d), jnp.float32)],
        ),
        compiler_params=pltpu.CompilerParams(
            dimension_semantics=("parallel", "arbitrary"),
            vmem_limit_bytes=48 * 1024 * 1024,   # fits v7x's 64 MiB physical
        ),
        cost_estimate=pl.CostEstimate(
            flops=flops, transcendentals=0, bytes_accessed=bytes_accessed),
        input_output_aliases={2: 1},             # sum_in buffer -> sum_out
    )


# ----------------------------------------------------------------------------
# Kernel 2: per-pair inner product, lane-dense output.
#   Inputs presented transposed (D, B_pad); reduction over sublanes (D),
#   output block (1, tb) is 128-lane dense -> unmasked stores.
# ----------------------------------------------------------------------------
def _score_kernel(u_ref, v_ref, o_ref):
    o_ref[...] = jnp.sum(u_ref[...] * v_ref[...], axis=0, keepdims=True)


def pairwise_score(users_emb, items_emb, *, tb=128):
    """gamma[b] = sum_d users_emb[b,d] * items_emb[b,d]."""
    B, D = users_emb.shape
    b_pad = _round_up(B, tb)
    # TODO(synk): fuse these gathers/transposes/pads into the kernel via
    # scalar-prefetched row indices; kept as plain-JAX glue for now.
    u_t = jnp.zeros((D, b_pad), jnp.float32).at[:, :B].set(
        users_emb.astype(jnp.float32).T)
    v_t = jnp.zeros((D, b_pad), jnp.float32).at[:, :B].set(
        items_emb.astype(jnp.float32).T)

    out = pl.pallas_call(
        _score_kernel,
        out_shape=jax.ShapeDtypeStruct((1, b_pad), jnp.float32),
        grid_spec=pltpu.PrefetchScalarGridSpec(
            num_scalar_prefetch=0,
            grid=(b_pad // tb,),
            in_specs=[
                pl.BlockSpec((D, tb), lambda i: (0, i)),
                pl.BlockSpec((D, tb), lambda i: (0, i)),
            ],
            out_specs=pl.BlockSpec((1, tb), lambda i: (0, i)),
        ),
        compiler_params=pltpu.CompilerParams(
            dimension_semantics=("parallel",),
            vmem_limit_bytes=32 * 1024 * 1024,
        ),
        cost_estimate=pl.CostEstimate(
            flops=2 * D * b_pad, transcendentals=0,
            bytes_accessed=2 * D * b_pad * 4 + b_pad * 4),
    )(u_t, v_t)
    return out[0, :B]


# ----------------------------------------------------------------------------
# PreferenceLayer (forward only), parameters built deterministically in-script.
# ----------------------------------------------------------------------------
class PreferenceLayerPallas:
    def __init__(self, num_users, num_items, emb_dim, n_layers, key,
                 *, tm=512, tk=2048):
        self.num_users = num_users
        self.num_items = num_items
        self.emb_dim = emb_dim
        self.n_layers = n_layers

        k_u, k_i, k_g = jax.random.split(key, 3)
        # nn.init.normal_(std=0.1)
        self.embedding_user = 0.1 * jax.random.normal(
            k_u, (num_users, emb_dim), dtype=jnp.float32)
        self.embedding_item = 0.1 * jax.random.normal(
            k_i, (num_items, emb_dim), dtype=jnp.float32)

        # Deterministic synthetic normalized bipartite adjacency (dense
        # stand-in for dataset.getSparseGraph()):  A = [[0, R], [R^T, 0]],
        # G = D^{-1/2} A D^{-1/2}
        R = (jax.random.uniform(k_g, (num_users, num_items)) < 0.4).astype(
            jnp.float32)
        N = num_users + num_items
        A = jnp.zeros((N, N), dtype=jnp.float32)
        A = A.at[:num_users, num_users:].set(R)
        A = A.at[num_users:, :num_users].set(R.T)
        deg = jnp.sum(A, axis=1)
        d_inv_sqrt = jnp.where(deg > 0, 1.0 / jnp.sqrt(deg), 0.0)
        self.graph = A * d_inv_sqrt[:, None] * d_inv_sqrt[None, :]

        # --- Tile selection (powers of two so padding = max(tm, tk)). ---
        tm = min(tm, max(8, _pow2_floor(_round_up(N, 8))))
        tk = min(tk, max(128, _pow2_floor(_round_up(N, 128))))
        assert tm & (tm - 1) == 0 and tk & (tk - 1) == 0
        n_pad = _round_up(N, max(tm, tk))
        self._tm, self._tk, self._n_pad = tm, tk, n_pad

        # --- Cache padded bf16 G once (avoids a per-forward N^2 cast/pad). ---
        g = jnp.zeros((n_pad, n_pad), jnp.bfloat16)
        self._g_bf16 = g.at[:N, :N].set(self.graph.astype(jnp.bfloat16))

        # --- Build the fused per-layer propagation kernel once. ---
        self._propagate = _make_propagate(n_pad, emb_dim, tm, tk)

    def computer(self):
        all_emb = jnp.concatenate([self.embedding_user, self.embedding_item],
                                  axis=0)                      # (N, D)
        N, D = all_emb.shape
        e0 = jnp.zeros((self._n_pad, D), jnp.float32).at[:N].set(all_emb)
        e_bf16 = e0.astype(jnp.bfloat16)     # layer-0 propagation input
        layer_sum = e0                       # layer-0 contribution stays f32
        for _ in range(self.n_layers):
            # Fused: next-layer bf16 input + updated f32 layer-sum per call.
            e_bf16, layer_sum = self._propagate(self._g_bf16, e_bf16, layer_sum)
        light_out = (layer_sum * (1.0 / float(self.n_layers + 1)))[:N]
        users = light_out[:self.num_users]
        items = light_out[self.num_users:]
        return users, items

    def forward(self, users, items):
        all_users, all_items = self.computer()
        users_emb = all_users[users]       # gather (glue, plain JAX)
        items_emb = all_items[items]
        return pairwise_score(users_emb, items_emb)   # (B,)


# ----------------------------------------------------------------------------
# Pure-JAX f32 reference for a sanity check.
# ----------------------------------------------------------------------------
def reference_forward(model, users, items):
    all_emb = jnp.concatenate([model.embedding_user, model.embedding_item], 0)
    embs = [all_emb]
    e = all_emb
    for _ in range(model.n_layers):
        e = model.graph @ e
        embs.append(e)
    light_out = jnp.mean(jnp.stack(embs, axis=1), axis=1)
    u = light_out[:model.num_users][users]
    v = light_out[model.num_users:][items]
    return jnp.sum(u * v, axis=1)


if __name__ == "__main__":
    # Case 1: tiny problem (single k step, single row tile after shrink).
    key = jax.random.PRNGKey(0)
    num_users, num_items, emb_dim, n_layers = 8, 8, 32, 2
    model = PreferenceLayerPallas(num_users, num_items, emb_dim, n_layers, key)

    k1, k2 = jax.random.split(jax.random.PRNGKey(1))
    batch = 8
    users = jax.random.randint(k1, (batch,), 0, num_users)
    items = jax.random.randint(k2, (batch,), 0, num_items)

    gamma = jax.block_until_ready(model.forward(users, items))
    ref = reference_forward(model, users, items)
    assert gamma.shape == (batch,)
    # bf16 MXU inputs on the propagation path -> looser tolerance vs f32 ref.
    assert jnp.allclose(gamma, ref, atol=1e-2, rtol=5e-2), (gamma, ref)

    # Case 2: multi-row-tile and multi-k grid to exercise the accumulator
    # init/finalize and the fused layer-sum / aliased-output path.
    model2 = PreferenceLayerPallas(80, 80, 32, 3, jax.random.PRNGKey(2),
                                   tm=64, tk=128)
    k3, k4 = jax.random.split(jax.random.PRNGKey(3))
    users2 = jax.random.randint(k3, (16,), 0, 80)
    items2 = jax.random.randint(k4, (16,), 0, 80)
    gamma2 = jax.block_until_ready(model2.forward(users2, items2))
    ref2 = reference_forward(model2, users2, items2)
    assert gamma2.shape == (16,)
    assert jnp.allclose(gamma2, ref2, atol=1e-2, rtol=5e-2), (gamma2, ref2)

    print("KERNEL_OK")
</pallas_src>

<mosaic_0001>
module attributes {stable_mosaic.version = 11 : i64} {
  func.func @_propagate_kernel(%arg0: i32, %arg1: i32, %arg2: memref<16x128xbf16, #tpu.memory_space<vmem>>, %arg3: memref<128x32xbf16, #tpu.memory_space<vmem>>, %arg4: memref<16x32xf32, #tpu.memory_space<vmem>>, %arg5: memref<16x32xbf16, #tpu.memory_space<vmem>>, %arg6: memref<16x32xf32, #tpu.memory_space<vmem>>, %arg7: memref<16x32xf32, #tpu.memory_space<vmem>>) attributes {dimension_semantics = [#tpu.dimension_semantics<parallel>, #tpu.dimension_semantics<arbitrary>], iteration_bounds = array<i64: 8, 1>, scalar_prefetch = 0 : i64, scratch_operands = 1 : i64, tpu.core_type = #tpu.core_type<tc>, window_params = [{transform_indices = @transform_0, window_bounds = array<i64: 16, 128>}, {transform_indices = @transform_1, window_bounds = array<i64: 128, 32>}, {transform_indices = @transform_2, window_bounds = array<i64: 16, 32>}, {transform_indices = @transform_3, window_bounds = array<i64: 16, 32>}, {transform_indices = @transform_4, window_bounds = array<i64: 16, 32>}]} {
    %c0_i32 = arith.constant 0 : i32
    %0 = arith.cmpi eq, %arg1, %c0_i32 : i32
    %1 = arith.extui %0 : i1 to i32
    %c0_i32_0 = arith.constant 0 : i32
    %2 = arith.cmpi ne, %1, %c0_i32_0 : i32
    scf.if %2 {
      %cst_10 = arith.constant 0.000000e+00 : f32
      %12 = vector.broadcast %cst_10 : f32 to vector<16x32xf32>
      %c0_11 = arith.constant 0 : index
      %c0_12 = arith.constant 0 : index
      %13 = vector.load %arg7[%c0_11, %c0_12] : memref<16x32xf32, #tpu.memory_space<vmem>>, vector<16x32xf32>
      tpu.vector_store %arg7[%c0_11, %c0_12], %12 {strides = array<i32>} : memref<16x32xf32, #tpu.memory_space<vmem>>, vector<16x32xf32>,
    } else {
    }
    %c0 = arith.constant 0 : index
    %c0_1 = arith.constant 0 : index
    %3 = vector.load %arg7[%c0, %c0_1] : memref<16x32xf32, #tpu.memory_space<vmem>>, vector<16x32xf32>
    %c0_2 = arith.constant 0 : index
    %c0_3 = arith.constant 0 : index
    %4 = vector.load %arg2[%c0_2, %c0_3] : memref<16x128xbf16, #tpu.memory_space<vmem>>, vector<16x128xbf16>
    %c0_4 = arith.constant 0 : index
    %c0_5 = arith.constant 0 : index
    %5 = vector.load %arg3[%c0_4, %c0_5] : memref<128x32xbf16, #tpu.memory_space<vmem>>, vector<128x32xbf16>
    %cst = arith.constant dense<0.000000e+00> : vector<16x32xf32>
    %6 = tpu.matmul %4, %5, %cst {dimension_numbers = #tpu.dot_dimension_numbers<[1], [0], [0], [1], [0, 0, 1, 1], [], []>} : vector<16x128xbf16>, vector<128x32xbf16>, vector<16x32xf32> -> vector<16x32xf32>
    %7 = arith.addf %3, %6 : vector<16x32xf32>
    %c0_6 = arith.constant 0 : index
    %c0_7 = arith.constant 0 : index
    %8 = vector.load %arg7[%c0_6, %c0_7] : memref<16x32xf32, #tpu.memory_space<vmem>>, vector<16x32xf32>
    tpu.vector_store %arg7[%c0_6, %c0_7], %7 {strides = array<i32>} : memref<16x32xf32, #tpu.memory_space<vmem>>, vector<16x32xf32>,
    %c0_i32_8 = arith.constant 0 : i32
    %9 = arith.cmpi eq, %arg1, %c0_i32_8 : i32
    %10 = arith.extui %9 : i1 to i32
    %c0_i32_9 = arith.constant 0 : i32
    %11 = arith.cmpi ne, %10, %c0_i32_9 : i32
    scf.if %11 {
      %c0_10 = arith.constant 0 : index
      %c0_11 = arith.constant 0 : index
      %12 = vector.load %arg7[%c0_10, %c0_11] : memref<16x32xf32, #tpu.memory_space<vmem>>, vector<16x32xf32>
      %13 = arith.truncf %12 : vector<16x32xf32> to vector<16x32xbf16>
      %c0_12 = arith.constant 0 : index
      %c0_13 = arith.constant 0 : index
      %14 = vector.load %arg5[%c0_12, %c0_13] : memref<16x32xbf16, #tpu.memory_space<vmem>>, vector<16x32xbf16>
      tpu.vector_store %arg5[%c0_12, %c0_13], %13 {strides = array<i32>} : memref<16x32xbf16, #tpu.memory_space<vmem>>, vector<16x32xbf16>,
      %c0_14 = arith.constant 0 : index
      %c0_15 = arith.constant 0 : index
      %15 = vector.load %arg4[%c0_14, %c0_15] : memref<16x32xf32, #tpu.memory_space<vmem>>, vector<16x32xf32>
      %c0_16 = arith.constant 0 : index
      %c0_17 = arith.constant 0 : index
      %16 = vector.load %arg7[%c0_16, %c0_17] : memref<16x32xf32, #tpu.memory_space<vmem>>, vector<16x32xf32>
      %17 = arith.addf %15, %16 : vector<16x32xf32>
      %c0_18 = arith.constant 0 : index
      %c0_19 = arith.constant 0 : index
      %18 = vector.load %arg6[%c0_18, %c0_19] : memref<16x32xf32, #tpu.memory_space<vmem>>, vector<16x32xf32>
      tpu.vector_store %arg6[%c0_18, %c0_19], %17 {strides = array<i32>} : memref<16x32xf32, #tpu.memory_space<vmem>>, vector<16x32xf32>,
    } else {
    }
    return
  }
  func.func @transform_0(%arg0: i32, %arg1: i32) -> (i32, i32) {
    %c0_i32 = arith.constant 0 : i32
    return %arg0, %arg1 : i32, i32
  }
  func.func @transform_1(%arg0: i32, %arg1: i32) -> (i32, i32) {
    %c0_i32 = arith.constant 0 : i32
    %c0_i32_0 = arith.constant 0 : i32
    return %arg1, %c0_i32 : i32, i32
  }
  func.func @transform_2(%arg0: i32, %arg1: i32) -> (i32, i32) {
    %c0_i32 = arith.constant 0 : i32
    %c0_i32_0 = arith.constant 0 : i32
    return %arg0, %c0_i32 : i32, i32
  }
  func.func @transform_3(%arg0: i32, %arg1: i32) -> (i32, i32) {
    %c0_i32 = arith.constant 0 : i32
    %c0_i32_0 = arith.constant 0 : i32
    return %arg0, %c0_i32 : i32, i32
  }
  func.func @transform_4(%arg0: i32, %arg1: i32) -> (i32, i32) {
    %c0_i32 = arith.constant 0 : i32
    %c0_i32_0 = arith.constant 0 : i32
    return %arg0, %c0_i32 : i32, i32
  }
}

</mosaic_0001>

<llo_original>
// kernel: tpu_custom_call.1
$region0: #{tpu_custom_call.1}
  #allocation0 [shape = 'u32[]', space=smem, size = 0x4, offset = 0x4, fixed_abs, tag = 'smem constant byte address 0x4 - core index']
  #allocation1 [shape = 'u32[144,128]{1,0:T(1,128)}', space=vmem, size = 0x12000, scoped, tag = 'internal scratch']
  #allocation2 [shape = 'f32[16,32]{1,0:T(8,128)}', space=vmem, size = 0x2000, scoped, tag = 'scratch operand']
  %s0 = inlined_call_operand.vmem [shape: bf16[128,128], index: 0, kind: input, shape index: {}]
  %s1 = inlined_call_operand.vmem [shape: bf16[128,32], index: 1, kind: input, shape index: {}]
  %s2 = inlined_call_operand.vmem [shape: f32[128,32], index: 2, kind: input, shape index: {}, may-alias: {2,4}]
  %s3 = inlined_call_operand.vmem [shape: bf16[128,32], index: 3, kind: output, shape index: {0}]
  %s4 = inlined_call_operand.vmem [shape: f32[128,32], index: 4, kind: output, shape index: {1}, may-alias: {2,4}]
  %5 = xla_tuple %s3, %s4
  %s6 = sld [smem:[#allocation0]]
  $region61: #{tpu_custom_call.1} parent=0
    _
  %s8 = ssub.s32 1, %s6
  %s9 = scalar_select 0, %s8, %s6
  loop: start=0, step=1, limit=10
  $region2: #{tpu_custom_call.1} parent=0 // loop_pre_header
    _
  $region3: #{tpu_custom_call.1} parent=0 // loop_header
    %s11 = sphi 0, %s15
    %p12 = scmp.ge.s32.totalorder %s11, 10
    %s18 = sphi 0, %s30
    %s19 = sphi 0, %s26
    %s20 = sphi 0, %s18
    %s21 = sphi 0, %s19
    %s22 = sphi 0, %s20
    %s23 = sphi 0, %s21
    %s35 = sphi 0, %s37
    %s38 = sphi 0, %s35
    %s39 = sphi 0, %s38
    %s55 = sphi 0, %s39
    %s61 = sphi 0, %s63
    %s64 = sphi 0, %s61
    %s65 = sphi 0, %s64
    %s81 = sphi 0, %s65
    %s87 = sphi 0, %s89
    %s90 = sphi 0, %s87
    %s91 = sphi 0, %s90
    %s107 = sphi 0, %s91
    %s113 = sphi 0, %s115
    %s116 = sphi 0, %s113
    %s117 = sphi 0, %s116
    %s133 = sphi 0, %s117
    %s139 = sphi 0, %s141
    %s142 = sphi 0, %s139
    %s143 = sphi 0, %s142
    %s159 = sphi 0, %s143
  $region4: #{tpu_custom_call.1} parent=0 // loop_header_branch
    %14 = sbr.rel (%p12) target = $region8
  $region5: #{tpu_custom_call.1} parent=0 // loop_body
    %s16 = ssub.s32 %s11, 1
    %s17 = ssub.s32 %s11, 2
    %s24 = sadd.s32 1, %s19
    %p25 = scmp.ge.s32.totalorder %s24, 1
    %s26 = scalar_select %p25, 0, %s24
    %s27 = sadd.s32 1, %s18
    %s28 = scalar_select %p25, %s27, %s18
    %p29 = scmp.ge.s32.totalorder %s28, 8
    %s30 = scalar_select %p29, 0, %s28
    %s31 = ssub.s32 %s18, %s30
    %s32 = ssub.s32 %s19, %s26
    %s33 = sor.u32 %s31, %s32
    %p34 = scmp.eq.s32.totalorder %s33, 0
    %s36 = sadd.s32 %s35, 1
    %s37 = scalar_select %p34, %s35, %s36
    %p40 = pneg %p34
    %p41 = scmp.eq.s32.totalorder %s11, 7
    %p42 = por %p40, %p41
    %p43 = scmp.ne.s32.totalorder %s35, %s38
    %p44 = scmp.eq.s32.totalorder %s11, 0
    %p45 = por %p43, %p44
    %p46 = scmp.ne.s32.totalorder %s35, %s38
    %p47 = scmp.eq.s32.totalorder %s16, 7
    %p48 = por %p46, %p47
    %p49 = scmp.ne.s32.totalorder %s38, %s39
    %p50 = scmp.eq.s32.totalorder %s16, 0
    %p51 = por %p49, %p50
    %p52 = scmp.ne.s32.totalorder %s38, %s39
    %p53 = scmp.eq.s32.totalorder %s17, 7
    %p54 = por %p52, %p53
    %p56 = scmp.ne.s32.totalorder %s39, %s55
    %p57 = scmp.eq.s32.totalorder %s17, 0
    %p58 = por %p56, %p57
    %s59 = ssub.s32 %s19, %s26
    %p60 = scmp.eq.s32.totalorder %s59, 0
    %s62 = sadd.s32 %s61, 1
    %s63 = scalar_select %p60, %s61, %s62
    %p66 = pneg %p60
    %p67 = scmp.eq.s32.totalorder %s11, 7
    %p68 = por %p66, %p67
    %p69 = scmp.ne.s32.totalorder %s61, %s64
    %p70 = scmp.eq.s32.totalorder %s11, 0
    %p71 = por %p69, %p70
    %p72 = scmp.ne.s32.totalorder %s61, %s64
    %p73 = scmp.eq.s32.totalorder %s16, 7
    %p74 = por %p72, %p73
    %p75 = scmp.ne.s32.totalorder %s64, %s65
    %p76 = scmp.eq.s32.totalorder %s16, 0
    %p77 = por %p75, %p76
    %p78 = scmp.ne.s32.totalorder %s64, %s65
    %p79 = scmp.eq.s32.totalorder %s17, 7
    %p80 = por %p78, %p79
    %p82 = scmp.ne.s32.totalorder %s65, %s81
    %p83 = scmp.eq.s32.totalorder %s17, 0
    %p84 = por %p82, %p83
    %s85 = ssub.s32 %s18, %s30
    %p86 = scmp.eq.s32.totalorder %s85, 0
    %s88 = sadd.s32 %s87, 1
    %s89 = scalar_select %p86, %s87, %s88
    %p92 = pneg %p86
    %p93 = scmp.eq.s32.totalorder %s11, 7
    %p94 = por %p92, %p93
    %p95 = scmp.ne.s32.totalorder %s87, %s90
    %p96 = scmp.eq.s32.totalorder %s11, 0
    %p97 = por %p95, %p96
    %p98 = scmp.ne.s32.totalorder %s87, %s90
    %p99 = scmp.eq.s32.totalorder %s16, 7
    %p100 = por %p98, %p99
    %p101 = scmp.ne.s32.totalorder %s90, %s91
    %p102 = scmp.eq.s32.totalorder %s16, 0
    %p103 = por %p101, %p102
    %p104 = scmp.ne.s32.totalorder %s90, %s91
    %p105 = scmp.eq.s32.totalorder %s17, 7
    %p106 = por %p104, %p105
    %p108 = scmp.ne.s32.totalorder %s91, %s107
    %p109 = scmp.eq.s32.totalorder %s17, 0
    %p110 = por %p108, %p109
    %s111 = ssub.s32 %s18, %s30
    %p112 = scmp.eq.s32.totalorder %s111, 0
    %s114 = sadd.s32 %s113, 1
    %s115 = scalar_select %p112, %s113, %s114
    %p118 = pneg %p112
    %p119 = scmp.eq.s32.totalorder %s11, 7
    %p120 = por %p118, %p119
    %p121 = scmp.ne.s32.totalorder %s113, %s116
    %p122 = scmp.eq.s32.totalorder %s11, 0
    %p123 = por %p121, %p122
    %p124 = scmp.ne.s32.totalorder %s113, %s116
    %p125 = scmp.eq.s32.totalorder %s16, 7
    %p126 = por %p124, %p125
    %p127 = scmp.ne.s32.totalorder %s116, %s117
    %p128 = scmp.eq.s32.totalorder %s16, 0
    %p129 = por %p127, %p128
    %p130 = scmp.ne.s32.totalorder %s116, %s117
    %p131 = scmp.eq.s32.totalorder %s17, 7
    %p132 = por %p130, %p131
    %p134 = scmp.ne.s32.totalorder %s117, %s133
    %p135 = scmp.eq.s32.totalorder %s17, 0
    %p136 = por %p134, %p135
    %s137 = ssub.s32 %s18, %s30
    %p138 = scmp.eq.s32.totalorder %s137, 0
    %s140 = sadd.s32 %s139, 1
    %s141 = scalar_select %p138, %s139, %s140
    %p144 = pneg %p138
    %p145 = scmp.eq.s32.totalorder %s11, 7
    %p146 = por %p144, %p145
    %p147 = scmp.ne.s32.totalorder %s139, %s142
    %p148 = scmp.eq.s32.totalorder %s11, 0
    %p149 = por %p147, %p148
    %p150 = scmp.ne.s32.totalorder %s139, %s142
    %p151 = scmp.eq.s32.totalorder %s16, 7
    %p152 = por %p150, %p151
    %p153 = scmp.ne.s32.totalorder %s142, %s143
    %p154 = scmp.eq.s32.totalorder %s16, 0
    %p155 = por %p153, %p154
    %p156 = scmp.ne.s32.totalorder %s142, %s143
    %p157 = scmp.eq.s32.totalorder %s17, 7
    %p158 = por %p156, %p157
    %p160 = scmp.ne.s32.totalorder %s143, %s159
    %p161 = scmp.eq.s32.totalorder %s17, 0
    %p162 = por %p160, %p161
    %p163 = scmp.le.s32.totalorder 1, %s11
    %p164 = scmp.lt.s32.totalorder %s11, 9
    %p165 = pnand %p163, %p164
    %p166 = pneg %p165
    // Predicated region
    $region9: #{tpu_custom_call.1} parent=5 // pred_check
      _
    $region10: #{tpu_custom_call.1} parent=5 // pred_check_branch
      %168 = sbr.rel (%p165) target = $region12
    $region11: #{tpu_custom_call.1} parent=5 // pred_region
      %s169 = ssub.s32 %s11, 1
      // Predicated region
      $region13: #{tpu_custom_call.1} parent=11 // pred_check
        %p170 = pneg %p77
      $region14: #{tpu_custom_call.1} parent=11 // pred_check_branch
        %172 = sbr.rel (%p170) target = $region16
      $region15: #{tpu_custom_call.1} parent=11 // pred_region
        %s173 = smul.u32 16, %s21
        %p174 = scmp.lt.s32.totalorder %s173, 15
        %s175 = scalar_select %p174, %s173, 15
        %s176 = smul.addr %s175, 4
        %s177 = scalar_lea.vmem %s1, %s176
        %s178 = smul.u32 16, %s21
      $region16: #{tpu_custom_call.1} parent=11 // pred_fallthru
        _
    $region12: #{tpu_custom_call.1} parent=5 // pred_fallthru
      _
    %p179 = scmp.lt.s32.totalorder %s11, 8
    // Predicated region
    $region17: #{tpu_custom_call.1} parent=5 // pred_check
      %p180 = pneg %p179
    $region18: #{tpu_custom_call.1} parent=5 // pred_check_branch
      %182 = sbr.rel (%p180) target = $region20
    $region19: #{tpu_custom_call.1} parent=5 // pred_region
      // Predicated region
      $region21: #{tpu_custom_call.1} parent=19 // pred_check
        %p183 = pneg %p45
      $region22: #{tpu_custom_call.1} parent=19 // pred_check_branch
        %185 = sbr.rel (%p183) target = $region24
      $region23: #{tpu_custom_call.1} parent=19 // pred_region
        %s186 = smul.u32 2, %s18
        %p187 = scmp.lt.s32.totalorder %s186, 15
        %s188 = scalar_select %p187, %s186, 15
        %p189 = scmp.lt.s32.totalorder %s19, 0
        %s190 = scalar_select %p189, %s19, 0
        %s191 = sadd.s32 %s190, %s188
        %s192 = smul.addr %s191, 4
        %s193 = scalar_lea.vmem %s0, %s192
        %s194 = smul.u32 2, %s18
      $region24: #{tpu_custom_call.1} parent=19 // pred_fallthru
        _
      // Predicated region
      $region25: #{tpu_custom_call.1} parent=19 // pred_check
        %p195 = pneg %p97
      $region26: #{tpu_custom_call.1} parent=19 // pred_check_branch
        %197 = sbr.rel (%p195) target = $region28
      $region27: #{tpu_custom_call.1} parent=19 // pred_region
        %s198 = smul.u32 2, %s18
        %p199 = scmp.lt.s32.totalorder %s198, 15
        %s200 = scalar_select %p199, %s198, 15
        %s201 = smul.addr %s200, 8
        %s202 = scalar_lea.vmem %s2, %s201
        %s203 = smul.u32 2, %s18
      $region28: #{tpu_custom_call.1} parent=19 // pred_fallthru
        _
    $region20: #{tpu_custom_call.1} parent=5 // pred_fallthru
      _
    %p204 = scmp.le.s32.totalorder 1, %s11
    %p205 = scmp.lt.s32.totalorder %s11, 9
    %p206 = pnand %p204, %p205
    %p207 = pneg %p206
    // Predicated region
    $region29: #{tpu_custom_call.1} parent=5 // pred_check
      _
    $region30: #{tpu_custom_call.1} parent=5 // pred_check_branch
      %209 = sbr.rel (%p206) target = $region32
    $region31: #{tpu_custom_call.1} parent=5 // pred_region
      %s210 = ssub.s32 %s11, 1
      %s211 = smul.u32 2, %s20
      %p212 = scmp.lt.s32.totalorder %s211, 15
      %s213 = scalar_select %p212, %s211, 15
      %p214 = scmp.lt.s32.totalorder %s21, 0
      %s215 = scalar_select %p214, %s21, 0
      %s216 = sadd.s32 %s215, %s213
      %s217 = smul.addr %s216, 4
      %s218 = scalar_lea.vmem %s0, %s217
      %p219 = pneg %p51
      %p220 = pneg %p48
      %s221 = smul.u32 16, %s21
      %p222 = scmp.lt.s32.totalorder %s221, 15
      %s223 = scalar_select %p222, %s221, 15
      %s224 = smul.addr %s223, 4
      %s225 = scalar_lea.vmem %s1, %s224
      %p226 = pneg %p77
      %p227 = pneg %p74
      %s228 = smul.u32 2, %s20
      %p229 = scmp.lt.s32.totalorder %s228, 15
      %s230 = scalar_select %p229, %s228, 15
      %s231 = smul.addr %s230, 8
      %s232 = scalar_lea.vmem %s2, %s231
      %p233 = pneg %p103
      %p234 = pneg %p100
      %p235 = pneg %p129
      %p236 = pneg %p126
      %s237 = smul.u32 2, %s20
      %p238 = scmp.lt.s32.totalorder %s237, 15
      %s239 = scalar_select %p238, %s237, 15
      %s240 = smul.addr %s239, 4
      %s241 = scalar_lea.vmem %s3, %s240
      %p242 = pneg %p155
      %p243 = pneg %p152
      %s244 = smul.u32 2, %s20
      %p245 = scmp.lt.s32.totalorder %s244, 15
      %s246 = scalar_select %p245, %s244, 15
      %s247 = smul.addr %s246, 8
      %s248 = scalar_lea.vmem %s4, %s247
      %s249 = smul.u32 2, %s20
      %p250 = scmp.lt.s32.totalorder %s249, 15
      %s251 = scalar_select %p250, %s249, 15
      %p252 = scmp.lt.s32.totalorder %s21, 0
      %s253 = scalar_select %p252, %s21, 0
      %s254 = sadd.s32 %s253, %s251
      %s255 = smul.addr %s254, 4
      %s256 = scalar_lea.vmem %s0, %s255
      %s257 = smul.u32 2, %s20
      %s258 = smul.u32 16, %s21
      %p259 = scmp.lt.s32.totalorder %s258, 15
      %s260 = scalar_select %p259, %s258, 15
      %s261 = smul.addr %s260, 4
      %s262 = scalar_lea.vmem %s1, %s261
      %s263 = smul.u32 16, %s21
      %s264 = smul.u32 2, %s20
      %p265 = scmp.lt.s32.totalorder %s264, 15
      %s266 = scalar_select %p265, %s264, 15
      %s267 = smul.addr %s266, 8
      %s268 = scalar_lea.vmem %s2, %s267
      %s269 = smul.u32 2, %s20
      %s270 = smul.u32 2, %s20
      %p271 = scmp.lt.s32.totalorder %s270, 15
      %s272 = scalar_select %p271, %s270, 15
      %s273 = smul.addr %s272, 4
      %s274 = scalar_lea.vmem %s3, %s273
      %s275 = smul.u32 2, %s20
      %s276 = smul.u32 2, %s20
      %p277 = scmp.lt.s32.totalorder %s276, 15
      %s278 = scalar_select %p277, %s276, 15
      %s279 = smul.addr %s278, 8
      %s280 = scalar_lea.vmem %s4, %s279
      %s281 = smul.u32 2, %s20
      %p283 = scmp.eq.s32.totalorder %s21, 0
      // Predicated region
      $region33: #{tpu_custom_call.1} parent=31 // pred_check
        %p284 = pneg %p283
      $region34: #{tpu_custom_call.1} parent=31 // pred_check_branch
        %286 = sbr.rel (%p284) target = $region36
      $region35: #{tpu_custom_call.1} parent=31 // pred_region
        %vm287 = vcmask 261120
        %288 = vst.msk [vmem:[#allocation2] sm:$0xff] %vm287, 0.0
        %289 = vst.msk [vmem:[#allocation2 + $0x8] sm:$0xff] %vm287, 0.0
      $region36: #{tpu_custom_call.1} parent=31 // pred_fallthru
        _
      %v290 = vld [vmem:[#allocation2] sm:$0xff]
      %v291 = vld [vmem:[#allocation2 + $0x8] sm:$0xff]
      %v292 = vld [vmem:[%s256] sm:$0xf]
      %v293 = vld [vmem:[%s256 + $0x4] sm:$0xf]
      %v294 = vld [vmem:[%s262] sm:$0xf]
      %v295 = vld [vmem:[%s262 + $0x4] sm:$0xf]
      %v296 = vld [vmem:[%s262 + $0x8] sm:$0xf]
      %v297 = vld [vmem:[%s262 + $0xc] sm:$0xf]
      %v298 = vld [vmem:[%s262 + $0x10] sm:$0xf]
      %v299 = vld [vmem:[%s262 + $0x14] sm:$0xf]
      %v300 = vld [vmem:[%s262 + $0x18] sm:$0xf]
      %v301 = vld [vmem:[%s262 + $0x1c] sm:$0xf]
      %v302 = vld [vmem:[%s262 + $0x20] sm:$0xf]
      %v303 = vld [vmem:[%s262 + $0x24] sm:$0xf]
      %v304 = vld [vmem:[%s262 + $0x28] sm:$0xf]
      %v305 = vld [vmem:[%s262 + $0x2c] sm:$0xf]
      %v306 = vld [vmem:[%s262 + $0x30] sm:$0xf]
      %v307 = vld [vmem:[%s262 + $0x34] sm:$0xf]
      %v308 = vld [vmem:[%s262 + $0x38] sm:$0xf]
      %v309 = vld [vmem:[%s262 + $0x3c] sm:$0xf]
      %v312 = vunpack.c.l.b16 %v292
      %v313 = vunpack.c.l.b16 %v293
      %v314 = vpack.c.b16 %v313, %v312
      %v332 = vunpack.c.l.b16 %v294
      %v333 = vunpack.c.l.b16 %v295
      %v334 = vunpack.c.l.b16 %v296
      %v335 = vunpack.c.l.b16 %v297
      %v336 = vunpack.c.l.b16 %v298
      %v337 = vunpack.c.l.b16 %v299
      %v338 = vunpack.c.l.b16 %v300
      %v339 = vunpack.c.l.b16 %v301
      %v340 = vunpack.c.l.b16 %v302
      %v341 = vunpack.c.l.b16 %v303
      %v342 = vunpack.c.l.b16 %v304
      %v343 = vunpack.c.l.b16 %v305
      %v344 = vunpack.c.l.b16 %v306
      %v345 = vunpack.c.l.b16 %v307
      %v346 = vunpack.c.l.b16 %v308
      %v347 = vunpack.c.l.b16 %v309
      %v348 = vpack.c.b16 %v333, %v332
      %v349 = vpack.c.b16 %v335, %v334
      %v350 = vpack.c.b16 %v337, %v336
      %v351 = vpack.c.b16 %v339, %v338
      %v352 = vpack.c.b16 %v341, %v340
      %v353 = vpack.c.b16 %v343, %v342
      %v354 = vpack.c.b16 %v345, %v344
      %v355 = vpack.c.b16 %v347, %v346
      %364 = vmatprep.subr.bf16.mxu0 0
      %365 = vmatpush1.bf16.msra.mxu0 %v348
      %366 = vmatprep.subr.bf16.mxu0 0
      %367 = vmatpush1.bf16.msra.mxu0 %v349
      %368 = vmatprep.subr.bf16.mxu0 0
      %369 = vmatpush1.bf16.msra.mxu0 %v350
      %370 = vmatprep.subr.bf16.mxu0 0
      %371 = vmatpush1.bf16.msra.mxu0 %v351
      %372 = vmatprep.subr.bf16.mxu0 0
      %373 = vmatpush1.bf16.msra.mxu0 %v352
      %374 = vmatprep.subr.bf16.mxu0 0
      %375 = vmatpush1.bf16.msra.mxu0 %v353
      %376 = vmatprep.subr.bf16.mxu0 0
      %377 = vmatpush1.bf16.msra.mxu0 %v354
      %378 = vmatprep.subr.bf16.mxu0 0
      %379 = vmatpush1.bf16.msra.mxu0 %v355
      %380 = vmatprep.subr.bf16.mxu0 0
      %381 = vmatpush1.bf16.msra.mxu0 0
      %382 = vmatprep.subr.bf16.mxu0 0
      %383 = vmatpush1.bf16.msra.mxu0 0
      %384 = vmatprep.subr.bf16.mxu0 0
      %385 = vmatpush1.bf16.msra.mxu0 0
      %386 = vmatprep.subr.bf16.mxu0 0
      %387 = vmatpush1.bf16.msra.mxu0 0
      %388 = vmatprep.subr.bf16.mxu0 0
      %389 = vmatpush1.bf16.msra.mxu0 0
      %390 = vmatprep.subr.bf16.mxu0 0
      %391 = vmatpush1.bf16.msra.mxu0 0
      %392 = vmatprep.subr.bf16.mxu0 0
      %393 = vmatpush1.bf16.msra.mxu0 0
      %394 = vmatprep.subr.bf16.mxu0 0
      %395 = vmatpush1.bf16.msra.mxu0 0
      %396 = vmatprep.mubr.bf16.mxu0 0
      %397 = vmatmul.mubr.bf16.gmra.mrb[0].mxu0 %v314
      %v398 = vpop.f32.mrb[0].mxu0
      %v399 = vadd.f32 0.0, %v398
      %v400 = vpop.f32.mrb[0].mxu0
      %v401 = vpop.f32.mrb[0].mxu0
      %v402 = vadd.f32 0.0, %v401
      %v403 = vpop.f32.mrb[0].mxu0
      %404 = vdwg.mxu0
      %v405 = vadd.f32 %v290, %v399
      %v406 = vadd.f32 %v291, %v402
      %vm407 = vcmask 261120
      %408 = vst.msk [vmem:[#allocation2] sm:$0xff] %vm407, %v405
      %409 = vst.msk [vmem:[#allocation2 + $0x8] sm:$0xff] %vm407, %v406
      // Predicated region
      $region37: #{tpu_custom_call.1} parent=31 // pred_check
        %p410 = pneg %p283
      $region38: #{tpu_custom_call.1} parent=31 // pred_check_branch
        %412 = sbr.rel (%p410) target = $region40
      $region39: #{tpu_custom_call.1} parent=31 // pred_region
        %v413 = vld [vmem:[#allocation2] sm:$0xff]
        %v414 = vld [vmem:[#allocation2 + $0x8] sm:$0xff]
        %v415 = vpack.c.bf16 %v414, %v413
        %v417 = vunpack.c.l.b16 %v415
        %v418 = vunpack.c.h.b16 %v415
        %v419 = vpack.c.b16 %v417, %v417
        %v420 = vpack.c.b16 %v418, %v418
        %vm423 = vcmask 257024
        %424 = vst.msk [vmem:[%s274] sm:$0xf] %vm423, %v419
        %425 = vst.msk [vmem:[%s274 + $0x4] sm:$0xf] %vm423, %v420
        %v426 = vld [vmem:[%s268] sm:$0xff]
        %v427 = vld [vmem:[%s268 + $0x8] sm:$0xff]
        %v428 = vld [vmem:[#allocation2] sm:$0xff]
        %v429 = vld [vmem:[#allocation2 + $0x8] sm:$0xff]
        %v430 = vadd.f32 %v426, %v428
        %v431 = vadd.f32 %v427, %v429
        %432 = vst.msk [vmem:[%s280] sm:$0xff] %vm407, %v430
        %433 = vst.msk [vmem:[%s280 + $0x8] sm:$0xff] %vm407, %v431
      $region40: #{tpu_custom_call.1} parent=31 // pred_fallthru
        _
      %s434 = smul.u32 2, %s20
      %p435 = scmp.lt.s32.totalorder %s434, 15
      %s436 = scalar_select %p435, %s434, 15
      %s437 = smul.addr %s436, 4
      %s438 = scalar_lea.vmem %s3, %s437
      %s439 = smul.u32 2, %s20
      %p440 = scmp.lt.s32.totalorder %s439, 15
      %s441 = scalar_select %p440, %s439, 15
      %s442 = smul.addr %s441, 8
      %s443 = scalar_lea.vmem %s4, %s442
      // Predicated region
      $region41: #{tpu_custom_call.1} parent=31 // pred_check
        %p444 = pneg %p126
      $region42: #{tpu_custom_call.1} parent=31 // pred_check_branch
        %446 = sbr.rel (%p444) target = $region44
      $region43: #{tpu_custom_call.1} parent=31 // pred_region
        %s447 = smul.u32 2, %s20
      $region44: #{tpu_custom_call.1} parent=31 // pred_fallthru
        _
      // Predicated region
      $region45: #{tpu_custom_call.1} parent=31 // pred_check
        %p448 = pneg %p152
      $region46: #{tpu_custom_call.1} parent=31 // pred_check_branch
        %450 = sbr.rel (%p448) target = $region48
      $region47: #{tpu_custom_call.1} parent=31 // pred_region
        %s451 = smul.u32 2, %s20
      $region48: #{tpu_custom_call.1} parent=31 // pred_fallthru
        _
    $region32: #{tpu_custom_call.1} parent=5 // pred_fallthru
      _
    %p452 = scmp.le.s32.totalorder 2, %s11
    // Predicated region
    $region49: #{tpu_custom_call.1} parent=5 // pred_check
      %p453 = pneg %p452
    $region50: #{tpu_custom_call.1} parent=5 // pred_check_branch
      %455 = sbr.rel (%p453) target = $region52
    $region51: #{tpu_custom_call.1} parent=5 // pred_region
      %s456 = ssub.s32 %s11, 2
      // Predicated region
      $region53: #{tpu_custom_call.1} parent=51 // pred_check
        %p457 = pneg %p132
      $region54: #{tpu_custom_call.1} parent=51 // pred_check_branch
        %459 = sbr.rel (%p457) target = $region56
      $region55: #{tpu_custom_call.1} parent=51 // pred_region
        %s460 = smul.u32 2, %s22
        %p461 = scmp.lt.s32.totalorder %s460, 15
        %s462 = scalar_select %p461, %s460, 15
        %s463 = smul.addr %s462, 4
        %s464 = scalar_lea.vmem %s3, %s463
      $region56: #{tpu_custom_call.1} parent=51 // pred_fallthru
        _
      // Predicated region
      $region57: #{tpu_custom_call.1} parent=51 // pred_check
        %p465 = pneg %p158
      $region58: #{tpu_custom_call.1} parent=51 // pred_check_branch
        %467 = sbr.rel (%p465) target = $region60
      $region59: #{tpu_custom_call.1} parent=51 // pred_region
        %s468 = smul.u32 2, %s22
        %p469 = scmp.lt.s32.totalorder %s468, 15
        %s470 = scalar_select %p469, %s468, 15
        %s471 = smul.addr %s470, 8
        %s472 = scalar_lea.vmem %s4, %s471
      $region60: #{tpu_custom_call.1} parent=51 // pred_fallthru
        _
    $region52: #{tpu_custom_call.1} parent=5 // pred_fallthru
      _
  $region6: #{tpu_custom_call.1} parent=0 // loop_footer
    %s15 = sadd.s32 1, %s11
  $region7: #{tpu_custom_call.1} parent=0 // loop_footer_branch
    %10 = sbr.rel target = $region3
  $region8: #{tpu_custom_call.1} parent=0 // loop_exit
    _

</llo_original>
